<compile_context>
chip_gen: v6e
topology: v6e:2x2x1
jax: 0.10.0
libtpu: 0.0.40
codegen_flags: <defaults>
</compile_context>

<pallas_src>
import functools

import jax
import jax.numpy as jnp
from jax.experimental import pallas as pl
from jax.experimental.pallas import tpu as pltpu

LANES = 128
SUBLANES = 8


def _round_up(a, m):
    return (a + m - 1) // m * m


def _cdiv(a, b):
    return (a + b - 1) // b


def mlp_kernel(x_ref, w1_ref, b1_ref, w2_ref, b2_ref,
               w3_ref, b3_ref, w4_ref, b4_ref, o_ref):
    """One batch tile of the fully fused MLP. All weights (<0.5 MiB) live in VMEM."""
    bf16 = jnp.bfloat16
    x = x_ref[...]                                                    # (TB, F) f32
    # Layer 1: narrow K (=num_features) kept in f32 — exact and tiny on the MXU.
    h = jnp.dot(x, w1_ref[...], preferred_element_type=jnp.float32) + b1_ref[...]
    h = jnp.maximum(h, 0.0).astype(bf16)                              # (TB, 512)
    # Layers 2-4: bf16 operands, f32 MXU accumulation, f32 bias add.
    h = jnp.dot(h, w2_ref[...], preferred_element_type=jnp.float32) + b2_ref[...]
    h = jnp.maximum(h, 0.0).astype(bf16)                              # (TB, 256)
    h = jnp.dot(h, w3_ref[...], preferred_element_type=jnp.float32) + b3_ref[...]
    h = jnp.maximum(h, 0.0).astype(bf16)                              # (TB, 128) padded
    o = jnp.dot(h, w4_ref[...], preferred_element_type=jnp.float32) + b4_ref[...]
    o_ref[...] = o.astype(o_ref.dtype)                                # (TB, Cp) bf16


def prepare_params(params):
    """One-time cast/pad of the weights into the kernel layout. Call once, reuse.

    Returns (prepared_arrays, num_classes). Padded H3/C lanes are zero-filled so the
    math stays exact; the wrapper slices the real classes back out.
    """
    (w1, b1), (w2, b2), (w3, b3), (w4, b4) = params
    F, H1 = w1.shape
    H2 = w2.shape[1]
    H3 = w3.shape[1]
    C = w4.shape[1]
    H3p = _round_up(max(H3, LANES), LANES)
    Cp = _round_up(max(C, LANES), LANES)
    bf16 = jnp.bfloat16

    w1_p = w1.astype(jnp.float32)                       # (F, 512), narrow K stays f32
    b1_p = b1.reshape(1, H1).astype(jnp.float32)
    w2_p = w2.astype(bf16)                              # (512, 256)
    b2_p = b2.reshape(1, H2).astype(jnp.float32)
    w3_p = jnp.pad(w3.astype(bf16), ((0, 0), (0, H3p - H3)))          # (256, 128)
    b3_p = jnp.pad(b3.reshape(1, H3).astype(jnp.float32), ((0, 0), (0, H3p - H3)))
    w4_p = jnp.pad(w4.astype(bf16), ((0, H3p - H3), (0, Cp - C)))     # (128, Cp)
    b4_p = jnp.pad(b4.reshape(1, C).astype(jnp.float32), ((0, 0), (0, Cp - C)))

    prepared = (w1_p, b1_p, w2_p, b2_p, w3_p, b3_p, w4_p, b4_p)
    return jax.device_put(prepared), C


@functools.partial(jax.jit, static_argnames=("num_classes", "block_b"))
def net_forward(x, prepared, num_classes, *, block_b=1024):
    w1, b1, w2, b2, w3, b3, w4, b4 = prepared
    B, F = x.shape
    H1 = w1.shape[1]
    H2 = w2.shape[1]
    H3p = w3.shape[1]
    Cp = w4.shape[1]

    # Balanced batch tiling: TB multiple of 8, tiles evenly sized, and >=2 tiles when
    # B >= 16 so the "parallel" axis shards across both v7x TensorCores.
    B8 = _round_up(B, SUBLANES)
    num_tiles = _cdiv(B8, block_b)
    if B8 >= 2 * SUBLANES:
        num_tiles = max(num_tiles, 2)
    TB = _round_up(_cdiv(B8, num_tiles), SUBLANES)
    Bp = _round_up(B8, TB)
    grid = (Bp // TB,)

    x = x.astype(jnp.float32)
    if Bp != B:
        # Padded rows compute relu(bias) garbage; they are sliced off below.
        x = jnp.pad(x, ((0, Bp - B), (0, 0)))

    def resident(shape):
        # Same block every grid step -> DMA'd once, stays resident in VMEM.
        return pl.BlockSpec(shape, lambda i: (0, 0))

    flops = 2 * Bp * (F * H1 + H1 * H2 + H2 * H3p + H3p * Cp)
    bytes_accessed = (
        Bp * F * 4
        + w1.size * 4 + w2.size * 2 + w3.size * 2 + w4.size * 2
        + (b1.size + b2.size + b3.size + b4.size) * 4
        + Bp * Cp * 2
    )

    out = pl.pallas_call(
        mlp_kernel,
        out_shape=jax.ShapeDtypeStruct((Bp, Cp), jnp.bfloat16),
        grid_spec=pltpu.PrefetchScalarGridSpec(
            num_scalar_prefetch=0,
            grid=grid,
            in_specs=[
                pl.BlockSpec((TB, F), lambda i: (i, 0)),   # x: batch-tiled, unpadded F
                resident((F, H1)), resident((1, H1)),
                resident((H1, H2)), resident((1, H2)),
                resident((H2, H3p)), resident((1, H3p)),
                resident((H3p, Cp)), resident((1, Cp)),
            ],
            out_specs=pl.BlockSpec((TB, Cp), lambda i: (i, 0)),
        ),
        compiler_params=pltpu.CompilerParams(
            dimension_semantics=("parallel",),
            vmem_limit_bytes=32 * 1024 * 1024,
        ),
        cost_estimate=pl.CostEstimate(
            flops=flops, transcendentals=0, bytes_accessed=bytes_accessed),
    )(x, w1, b1, w2, b2, w3, b3, w4, b4)

    # Slice real batch/classes and restore the module's f32 output dtype
    # (single small fused op).
    return out[:B, :num_classes].astype(jnp.float32)


def init_linear(key, fan_in, fan_out):
    # Mimics PyTorch nn.Linear default init (uniform +/- 1/sqrt(fan_in)).
    kw, kb = jax.random.split(key)
    bound = 1.0 / jnp.sqrt(fan_in)
    w = jax.random.uniform(kw, (fan_in, fan_out), jnp.float32, -bound, bound)
    b = jax.random.uniform(kb, (1, fan_out), jnp.float32, -bound, bound)
    return w, b


def init_params(key, num_features, num_classes):
    k1, k2, k3, k4 = jax.random.split(key, 4)
    return (
        init_linear(k1, num_features, 512),
        init_linear(k2, 512, 256),
        init_linear(k3, 256, 64),
        init_linear(k4, 64, num_classes),
    )


def reference_forward_kernel_numerics(x, params):
    # Matches kernel numerics: layer-1 f32, layers 2-4 bf16 operands / f32 accumulate.
    bf16 = jnp.bfloat16
    (w1, b1), (w2, b2), (w3, b3), (w4, b4) = params
    h = jnp.maximum(jnp.dot(x, w1, preferred_element_type=jnp.float32) + b1, 0.0)
    h = jnp.maximum(jnp.dot(h.astype(bf16), w2.astype(bf16),
                            preferred_element_type=jnp.float32) + b2, 0.0)
    h = jnp.maximum(jnp.dot(h.astype(bf16), w3.astype(bf16),
                            preferred_element_type=jnp.float32) + b3, 0.0)
    return jnp.dot(h.astype(bf16), w4.astype(bf16),
                   preferred_element_type=jnp.float32) + b4


def reference_forward_f32(x, params):
    (w1, b1), (w2, b2), (w3, b3), (w4, b4) = params
    h = jnp.maximum(x @ w1 + b1, 0.0)
    h = jnp.maximum(h @ w2 + b2, 0.0)
    h = jnp.maximum(h @ w3 + b3, 0.0)
    return h @ w4 + b4


if __name__ == "__main__":
    num_features = 10
    num_classes = 4
    batch = 8

    key = jax.random.PRNGKey(0)
    kx, kp = jax.random.split(key)
    x = jax.random.normal(kx, (batch, num_features), jnp.float32)
    params = init_params(kp, num_features, num_classes)

    # One-time weight layout prep (cast + lane padding); reuse for every forward.
    prepared, n_cls = prepare_params(params)

    out = net_forward(x, prepared, n_cls)
    jax.block_until_ready(out)

    assert out.shape == (batch, num_classes)
    assert out.dtype == jnp.float32

    ref_k = reference_forward_kernel_numerics(x, params)
    assert jnp.allclose(out, ref_k, atol=2e-2, rtol=2e-2), \
        float(jnp.max(jnp.abs(out - ref_k)))
    ref_f32 = reference_forward_f32(x, params)
    assert jnp.allclose(out, ref_f32, atol=5e-2, rtol=5e-2), \
        float(jnp.max(jnp.abs(out - ref_f32)))

    print("KERNEL_OK")
</pallas_src>

<mosaic_0001>
module attributes {stable_mosaic.version = 11 : i64} {
  func.func @mlp_kernel(%arg0: i32, %arg1: memref<8x10xf32, #tpu.memory_space<vmem>>, %arg2: memref<10x512xf32, #tpu.memory_space<vmem>>, %arg3: memref<1x512xf32, #tpu.memory_space<vmem>>, %arg4: memref<512x256xbf16, #tpu.memory_space<vmem>>, %arg5: memref<1x256xf32, #tpu.memory_space<vmem>>, %arg6: memref<256x128xbf16, #tpu.memory_space<vmem>>, %arg7: memref<1x128xf32, #tpu.memory_space<vmem>>, %arg8: memref<128x128xbf16, #tpu.memory_space<vmem>>, %arg9: memref<1x128xf32, #tpu.memory_space<vmem>>, %arg10: memref<8x128xbf16, #tpu.memory_space<vmem>>) attributes {dimension_semantics = [#tpu.dimension_semantics<parallel>], iteration_bounds = array<i64: 1>, scalar_prefetch = 0 : i64, scratch_operands = 0 : i64, tpu.core_type = #tpu.core_type<tc>, window_params = [{transform_indices = @transform_0, window_bounds = array<i64: 8, 10>}, {pipeline_mode = #tpu.pipeline_mode<synchronous>, transform_indices = @transform_1, window_bounds = array<i64: 10, 512>}, {pipeline_mode = #tpu.pipeline_mode<synchronous>, transform_indices = @transform_2, window_bounds = array<i64: 1, 512>}, {pipeline_mode = #tpu.pipeline_mode<synchronous>, transform_indices = @transform_3, window_bounds = array<i64: 512, 256>}, {pipeline_mode = #tpu.pipeline_mode<synchronous>, transform_indices = @transform_4, window_bounds = array<i64: 1, 256>}, {pipeline_mode = #tpu.pipeline_mode<synchronous>, transform_indices = @transform_5, window_bounds = array<i64: 256, 128>}, {pipeline_mode = #tpu.pipeline_mode<synchronous>, transform_indices = @transform_6, window_bounds = array<i64: 1, 128>}, {pipeline_mode = #tpu.pipeline_mode<synchronous>, transform_indices = @transform_7, window_bounds = array<i64: 128, 128>}, {pipeline_mode = #tpu.pipeline_mode<synchronous>, transform_indices = @transform_8, window_bounds = array<i64: 1, 128>}, {transform_indices = @transform_9, window_bounds = array<i64: 8, 128>}]} {
    %c0 = arith.constant 0 : index
    %c0_0 = arith.constant 0 : index
    %0 = vector.load %arg1[%c0, %c0_0] : memref<8x10xf32, #tpu.memory_space<vmem>>, vector<8x10xf32>
    %c0_1 = arith.constant 0 : index
    %c0_2 = arith.constant 0 : index
    %1 = vector.load %arg2[%c0_1, %c0_2] : memref<10x512xf32, #tpu.memory_space<vmem>>, vector<10x512xf32>
    %cst = arith.constant dense<0.000000e+00> : vector<8x512xf32>
    %2 = tpu.matmul %0, %1, %cst {dimension_numbers = #tpu.dot_dimension_numbers<[1], [0], [0], [1], [0, 0, 1, 1], [], []>} : vector<8x10xf32>, vector<10x512xf32>, vector<8x512xf32> -> vector<8x512xf32>
    %c0_3 = arith.constant 0 : index
    %c0_4 = arith.constant 0 : index
    %3 = vector.load %arg3[%c0_3, %c0_4] : memref<1x512xf32, #tpu.memory_space<vmem>>, vector<1x512xf32>
    %4 = vector.broadcast %3 : vector<1x512xf32> to vector<8x512xf32>
    %5 = arith.addf %2, %4 : vector<8x512xf32>
    %cst_5 = arith.constant 0.000000e+00 : f32
    %6 = vector.broadcast %cst_5 : f32 to vector<8x512xf32>
    %7 = arith.maximumf %5, %6 : vector<8x512xf32>
    %8 = arith.truncf %7 : vector<8x512xf32> to vector<8x512xbf16>
    %c0_6 = arith.constant 0 : index
    %c0_7 = arith.constant 0 : index
    %9 = vector.load %arg4[%c0_6, %c0_7] : memref<512x256xbf16, #tpu.memory_space<vmem>>, vector<512x256xbf16>
    %cst_8 = arith.constant dense<0.000000e+00> : vector<8x256xf32>
    %10 = tpu.matmul %8, %9, %cst_8 {dimension_numbers = #tpu.dot_dimension_numbers<[1], [0], [0], [1], [0, 0, 1, 1], [], []>} : vector<8x512xbf16>, vector<512x256xbf16>, vector<8x256xf32> -> vector<8x256xf32>
    %c0_9 = arith.constant 0 : index
    %c0_10 = arith.constant 0 : index
    %11 = vector.load %arg5[%c0_9, %c0_10] : memref<1x256xf32, #tpu.memory_space<vmem>>, vector<1x256xf32>
    %12 = vector.broadcast %11 : vector<1x256xf32> to vector<8x256xf32>
    %13 = arith.addf %10, %12 : vector<8x256xf32>
    %cst_11 = arith.constant 0.000000e+00 : f32
    %14 = vector.broadcast %cst_11 : f32 to vector<8x256xf32>
    %15 = arith.maximumf %13, %14 : vector<8x256xf32>
    %16 = arith.truncf %15 : vector<8x256xf32> to vector<8x256xbf16>
    %c0_12 = arith.constant 0 : index
    %c0_13 = arith.constant 0 : index
    %17 = vector.load %arg6[%c0_12, %c0_13] : memref<256x128xbf16, #tpu.memory_space<vmem>>, vector<256x128xbf16>
    %cst_14 = arith.constant dense<0.000000e+00> : vector<8x128xf32>
    %18 = tpu.matmul %16, %17, %cst_14 {dimension_numbers = #tpu.dot_dimension_numbers<[1], [0], [0], [1], [0, 0, 1, 1], [], []>} : vector<8x256xbf16>, vector<256x128xbf16>, vector<8x128xf32> -> vector<8x128xf32>
    %c0_15 = arith.constant 0 : index
    %c0_16 = arith.constant 0 : index
    %19 = vector.load %arg7[%c0_15, %c0_16] : memref<1x128xf32, #tpu.memory_space<vmem>>, vector<1x128xf32>
    %20 = vector.broadcast %19 : vector<1x128xf32> to vector<8x128xf32>
    %21 = arith.addf %18, %20 : vector<8x128xf32>
    %cst_17 = arith.constant 0.000000e+00 : f32
    %22 = vector.broadcast %cst_17 : f32 to vector<8x128xf32>
    %23 = arith.maximumf %21, %22 : vector<8x128xf32>
    %24 = arith.truncf %23 : vector<8x128xf32> to vector<8x128xbf16>
    %c0_18 = arith.constant 0 : index
    %c0_19 = arith.constant 0 : index
    %25 = vector.load %arg8[%c0_18, %c0_19] : memref<128x128xbf16, #tpu.memory_space<vmem>>, vector<128x128xbf16>
    %cst_20 = arith.constant dense<0.000000e+00> : vector<8x128xf32>
    %26 = tpu.matmul %24, %25, %cst_20 {dimension_numbers = #tpu.dot_dimension_numbers<[1], [0], [0], [1], [0, 0, 1, 1], [], []>} : vector<8x128xbf16>, vector<128x128xbf16>, vector<8x128xf32> -> vector<8x128xf32>
    %c0_21 = arith.constant 0 : index
    %c0_22 = arith.constant 0 : index
    %27 = vector.load %arg9[%c0_21, %c0_22] : memref<1x128xf32, #tpu.memory_space<vmem>>, vector<1x128xf32>
    %28 = vector.broadcast %27 : vector<1x128xf32> to vector<8x128xf32>
    %29 = arith.addf %26, %28 : vector<8x128xf32>
    %30 = arith.truncf %29 : vector<8x128xf32> to vector<8x128xbf16>
    %c0_23 = arith.constant 0 : index
    %c0_24 = arith.constant 0 : index
    %31 = vector.load %arg10[%c0_23, %c0_24] : memref<8x128xbf16, #tpu.memory_space<vmem>>, vector<8x128xbf16>
    tpu.vector_store %arg10[%c0_23, %c0_24], %30 {strides = array<i32>} : memref<8x128xbf16, #tpu.memory_space<vmem>>, vector<8x128xbf16>,
    return
  }
  func.func @transform_0(%arg0: i32) -> (i32, i32) {
    %c0_i32 = arith.constant 0 : i32
    %c0_i32_0 = arith.constant 0 : i32
    return %arg0, %c0_i32 : i32, i32
  }
  func.func @transform_1(%arg0: i32) -> (i32, i32) {
    %c0_i32 = arith.constant 0 : i32
    %c0_i32_0 = arith.constant 0 : i32
    %c0_i32_1 = arith.constant 0 : i32
    return %c0_i32, %c0_i32_0 : i32, i32
  }
  func.func @transform_2(%arg0: i32) -> (i32, i32) {
    %c0_i32 = arith.constant 0 : i32
    %c0_i32_0 = arith.constant 0 : i32
    %c0_i32_1 = arith.constant 0 : i32
    return %c0_i32, %c0_i32_0 : i32, i32
  }
  func.func @transform_3(%arg0: i32) -> (i32, i32) {
    %c0_i32 = arith.constant 0 : i32
    %c0_i32_0 = arith.constant 0 : i32
    %c0_i32_1 = arith.constant 0 : i32
    return %c0_i32, %c0_i32_0 : i32, i32
  }
  func.func @transform_4(%arg0: i32) -> (i32, i32) {
    %c0_i32 = arith.constant 0 : i32
    %c0_i32_0 = arith.constant 0 : i32
    %c0_i32_1 = arith.constant 0 : i32
    return %c0_i32, %c0_i32_0 : i32, i32
  }
  func.func @transform_5(%arg0: i32) -> (i32, i32) {
    %c0_i32 = arith.constant 0 : i32
    %c0_i32_0 = arith.constant 0 : i32
    %c0_i32_1 = arith.constant 0 : i32
    return %c0_i32, %c0_i32_0 : i32, i32
  }
  func.func @transform_6(%arg0: i32) -> (i32, i32) {
    %c0_i32 = arith.constant 0 : i32
    %c0_i32_0 = arith.constant 0 : i32
    %c0_i32_1 = arith.constant 0 : i32
    return %c0_i32, %c0_i32_0 : i32, i32
  }
  func.func @transform_7(%arg0: i32) -> (i32, i32) {
    %c0_i32 = arith.constant 0 : i32
    %c0_i32_0 = arith.constant 0 : i32
    %c0_i32_1 = arith.constant 0 : i32
    return %c0_i32, %c0_i32_0 : i32, i32
  }
  func.func @transform_8(%arg0: i32) -> (i32, i32) {
    %c0_i32 = arith.constant 0 : i32
    %c0_i32_0 = arith.constant 0 : i32
    %c0_i32_1 = arith.constant 0 : i32
    return %c0_i32, %c0_i32_0 : i32, i32
  }
  func.func @transform_9(%arg0: i32) -> (i32, i32) {
    %c0_i32 = arith.constant 0 : i32
    %c0_i32_0 = arith.constant 0 : i32
    return %arg0, %c0_i32 : i32, i32
  }
}

</mosaic_0001>

<llo_original>
// kernel: net_forward.1
$region0: #{net_forward.1}
  #allocation0 [shape = 'u32[]', space=smem, size = 0x4, offset = 0x4, fixed_abs, tag = 'smem constant byte address 0x4 - core index']
  #allocation1 [shape = 'u32[144,128]{1,0:T(1,128)}', space=vmem, size = 0x12000, scoped, tag = 'internal scratch']
  %s0 = inlined_call_operand.hbm [shape: f32[8,10], index: 0, kind: input, shape index: {}]
  %s1 = inlined_call_operand.hbm [shape: f32[10,512], index: 1, kind: input, shape index: {}]
  %s2 = inlined_call_operand.hbm [shape: f32[1,512], index: 2, kind: input, shape index: {}]
  %s3 = inlined_call_operand.hbm [shape: bf16[512,256], index: 3, kind: input, shape index: {}]
  %s4 = inlined_call_operand.vmem [shape: f32[1,256], index: 4, kind: input, shape index: {}]
  %s5 = inlined_call_operand.hbm [shape: bf16[256,128], index: 5, kind: input, shape index: {}]
  %s6 = inlined_call_operand.vmem [shape: f32[1,128], index: 6, kind: input, shape index: {}]
  %s7 = inlined_call_operand.hbm [shape: bf16[128,128], index: 7, kind: input, shape index: {}]
  %s8 = inlined_call_operand.vmem [shape: f32[1,128], index: 8, kind: input, shape index: {}]
  %s9 = inlined_call_operand.vmem [shape: bf16[8,128], index: 9, kind: output, shape index: {}]
  %s10 = sld [smem:[#allocation0]]
  $region70: #{net_forward.1} parent=0
    _
  %s12 = ssub.s32 1, %s10
  %s13 = scalar_select 0, %s12, %s10
  $region1: #{net_forward.1} parent=0
    #allocation2 [shape = 'u8[4096]{0}', space=vmem, size = 0x1000, scoped, tag = 'input window, operand 0, single buffered']
    #allocation3 [shape = 's32[1]{0}', space=sflag, size = 0x4, scoped, tag = 'scoped memory for net_forward.1']
    #allocation4 [shape = 'u8[32768]{0}', space=vmem, size = 0x8000, scoped, tag = 'input window, operand 1, single buffered']
    #allocation5 [shape = 's32[1]{0}', space=sflag, size = 0x4, scoped, tag = 'scoped memory for net_forward.1']
    #allocation6 [shape = 'u8[2048]{0}', space=vmem, size = 0x800, scoped, tag = 'input window, operand 2, single buffered']
    #allocation7 [shape = 'u8[262144]{0}', space=vmem, size = 0x40000, scoped, tag = 'input window, operand 3, single buffered']
    #allocation8 [shape = 's32[1]{0}', space=sflag, size = 0x4, scoped, tag = 'scoped memory for net_forward.1']
    #allocation9 [shape = 'u8[65536]{0}', space=vmem, size = 0x10000, scoped, tag = 'input window, operand 5, single buffered']
    #allocation10 [shape = 'u8[32768]{0}', space=vmem, size = 0x8000, scoped, tag = 'input window, operand 7, single buffered']
    #allocation11 [shape = 's32[1]{0}', space=sflag, size = 0x4, scoped, tag = 'scoped memory for net_forward.1']
    %14 = vsyncpa [#allocation3], 0
    %15 = vsyncpa [#allocation5], 0
    %16 = vsyncpa [#allocation8], 0
    %17 = vsyncpa [#allocation11], 0
    // Predicated region
    $region2: #{net_forward.1} parent=1 // pred_check
      _
    $region3: #{net_forward.1} parent=1 // pred_check_branch
      %19 = sbr.rel (0) target = $region5
    $region4: #{net_forward.1} parent=1 // pred_region
      %s21 = ssub.s32 128, 128
      %22 = vsyncadd [#allocation3], %s21
      %s24 = sshll.u32 [#allocation2], 4
      %s25 = int_to_ptr.vmem [resolvable:$true] %s24
      %27 = dma.hbm_to_vmem [thread:$0]  %s0, 128, %s25, [#allocation3]
    $region5: #{net_forward.1} parent=1 // pred_fallthru
      _
    // Predicated region
    $region6: #{net_forward.1} parent=1 // pred_check
      _
    $region7: #{net_forward.1} parent=1 // pred_check_branch
      %29 = sbr.rel (0) target = $region9
    $region8: #{net_forward.1} parent=1 // pred_region
      %s31 = ssub.s32 1024, 1024
      %32 = vsyncadd [#allocation5], %s31
      %s33 = sshll.u32 [#allocation4], 4
      %s34 = int_to_ptr.vmem [resolvable:$true] %s33
      %39 = dma.hbm_to_vmem [thread:$0]  %s1, 1024, %s34, [#allocation5], 512, 512, 32
    $region9: #{net_forward.1} parent=1 // pred_fallthru
      _
    // Predicated region
    $region10: #{net_forward.1} parent=1 // pred_check
      _
    $region11: #{net_forward.1} parent=1 // pred_check_branch
      %41 = sbr.rel (0) target = $region13
    $region12: #{net_forward.1} parent=1 // pred_region
      %s43 = ssub.s32 64, 64
      %44 = vsyncadd [#allocation5], %s43
      %s46 = sshll.u32 [#allocation6], 4
      %s47 = int_to_ptr.vmem [resolvable:$true] %s46
      %49 = dma.hbm_to_vmem [thread:$0]  %s2, 64, %s47, [#allocation5]
    $region13: #{net_forward.1} parent=1 // pred_fallthru
      _
    // Predicated region
    $region14: #{net_forward.1} parent=1 // pred_check
      _
    $region15: #{net_forward.1} parent=1 // pred_check_branch
      %51 = sbr.rel (0) target = $region17
    $region16: #{net_forward.1} parent=1 // pred_region
      %s53 = ssub.s32 8192, 8192
      %54 = vsyncadd [#allocation8], %s53
      %s55 = sshll.u32 [#allocation7], 4
      %s56 = int_to_ptr.vmem [resolvable:$true] %s55
      %61 = dma.hbm_to_vmem [thread:$0]  %s3, 8192, %s56, [#allocation8], 128, 128, 8
    $region17: #{net_forward.1} parent=1 // pred_fallthru
      _
    // Predicated region
    $region18: #{net_forward.1} parent=1 // pred_check
      _
    $region19: #{net_forward.1} parent=1 // pred_check_branch
      %63 = sbr.rel (0) target = $region21
    $region20: #{net_forward.1} parent=1 // pred_region
      _
    $region21: #{net_forward.1} parent=1 // pred_fallthru
      _
    // Predicated region
    $region22: #{net_forward.1} parent=1 // pred_check
      _
    $region23: #{net_forward.1} parent=1 // pred_check_branch
      %65 = sbr.rel (0) target = $region25
    $region24: #{net_forward.1} parent=1 // pred_region
      %s67 = ssub.s32 2048, 2048
      %68 = vsyncadd [#allocation8], %s67
      %s69 = sshll.u32 [#allocation9], 4
      %s70 = int_to_ptr.vmem [resolvable:$true] %s69
      %75 = dma.hbm_to_vmem [thread:$0]  %s5, 2048, %s70, [#allocation8], 64, 64, 4
    $region25: #{net_forward.1} parent=1 // pred_fallthru
      _
    // Predicated region
    $region26: #{net_forward.1} parent=1 // pred_check
      _
    $region27: #{net_forward.1} parent=1 // pred_check_branch
      %77 = sbr.rel (0) target = $region29
    $region28: #{net_forward.1} parent=1 // pred_region
      _
    $region29: #{net_forward.1} parent=1 // pred_fallthru
      _
    // Predicated region
    $region30: #{net_forward.1} parent=1 // pred_check
      _
    $region31: #{net_forward.1} parent=1 // pred_check_branch
      %79 = sbr.rel (0) target = $region33
    $region32: #{net_forward.1} parent=1 // pred_region
      %s81 = ssub.s32 1024, 1024
      %82 = vsyncadd [#allocation11], %s81
      %s83 = sshll.u32 [#allocation10], 4
      %s84 = int_to_ptr.vmem [resolvable:$true] %s83
      %89 = dma.hbm_to_vmem [thread:$0]  %s7, 1024, %s84, [#allocation11], 64, 64, 4
    $region33: #{net_forward.1} parent=1 // pred_fallthru
      _
    // Predicated region
    $region34: #{net_forward.1} parent=1 // pred_check
      _
    $region35: #{net_forward.1} parent=1 // pred_check_branch
      %91 = sbr.rel (0) target = $region37
    $region36: #{net_forward.1} parent=1 // pred_region
      _
    $region37: #{net_forward.1} parent=1 // pred_fallthru
      _
    // Predicated region
    $region38: #{net_forward.1} parent=1 // pred_check
      _
    $region39: #{net_forward.1} parent=1 // pred_check_branch
      %93 = sbr.rel (0) target = $region41
    $region40: #{net_forward.1} parent=1 // pred_region
      %94 = dma.done [#allocation3], 128
    $region41: #{net_forward.1} parent=1 // pred_fallthru
      _
    // Predicated region
    $region42: #{net_forward.1} parent=1 // pred_check
      _
    $region43: #{net_forward.1} parent=1 // pred_check_branch
      %96 = sbr.rel (0) target = $region45
    $region44: #{net_forward.1} parent=1 // pred_region
      %97 = dma.done [#allocation5], 1024
    $region45: #{net_forward.1} parent=1 // pred_fallthru
      _
    // Predicated region
    $region46: #{net_forward.1} parent=1 // pred_check
      _
    $region47: #{net_forward.1} parent=1 // pred_check_branch
      %99 = sbr.rel (0) target = $region49
    $region48: #{net_forward.1} parent=1 // pred_region
      %100 = dma.done [#allocation5], 64
    $region49: #{net_forward.1} parent=1 // pred_fallthru
      _
    // Predicated region
    $region50: #{net_forward.1} parent=1 // pred_check
      _
    $region51: #{net_forward.1} parent=1 // pred_check_branch
      %102 = sbr.rel (0) target = $region53
    $region52: #{net_forward.1} parent=1 // pred_region
      %103 = dma.done [#allocation8], 8192
    $region53: #{net_forward.1} parent=1 // pred_fallthru
      _
    // Predicated region
    $region54: #{net_forward.1} parent=1 // pred_check
      _
    $region55: #{net_forward.1} parent=1 // pred_check_branch
      %105 = sbr.rel (0) target = $region57
    $region56: #{net_forward.1} parent=1 // pred_region
      %106 = dma.done [#allocation8], 2048
    $region57: #{net_forward.1} parent=1 // pred_fallthru
      _
    // Predicated region
    $region58: #{net_forward.1} parent=1 // pred_check
      _
    $region59: #{net_forward.1} parent=1 // pred_check_branch
      %108 = sbr.rel (0) target = $region61
    $region60: #{net_forward.1} parent=1 // pred_region
      %109 = dma.done [#allocation11], 1024
    $region61: #{net_forward.1} parent=1 // pred_fallthru
      _
    %v111 = vld [vmem:[#allocation2] sm:$0xff]
    %v112 = vld [vmem:[#allocation4] sm:$0xff]
    %v113 = vld [vmem:[#allocation4 + $0x8] sm:$0xff]
    %v114 = vld [vmem:[#allocation4 + $0x10] sm:$0xff]
    %v115 = vld [vmem:[#allocation4 + $0x18] sm:$0xff]
    %v116 = vld [vmem:[#allocation4 + $0x20] sm:$0x3]
    %v117 = vld [vmem:[#allocation4 + $0x28] sm:$0x3]
    %v118 = vld [vmem:[#allocation4 + $0x30] sm:$0x3]
    %v119 = vld [vmem:[#allocation4 + $0x38] sm:$0x3]
    %v120 = vld [vmem:[#allocation6] sm:$0xf]
    %v122 = vlaneseq
    %v123 = vshrl.u32 %v122, 7
    %v124 = vsub.s32 0, %v123
    %v125 = vrot.slane %v120, %v124
    %v126 = vlaneseq
    %v127 = vshrl.u32 %v126, 7
    %v128 = vsub.s32 1, %v127
    %v129 = vrot.slane %v120, %v128
    %v130 = vlaneseq
    %v131 = vshrl.u32 %v130, 7
    %v132 = vsub.s32 2, %v131
    %v133 = vrot.slane %v120, %v132
    %v134 = vlaneseq
    %v135 = vshrl.u32 %v134, 7
    %v136 = vsub.s32 3, %v135
    %v137 = vrot.slane %v120, %v136
    %vm142 = vcmask 80896
    %v144 = vsel %vm142, %v111, 0
    %vm146 = vcmask 1041408
    %v148 = vsel %vm146, %v116, 0
    %v151 = vsel %vm146, %v117, 0
    %v154 = vsel %vm146, %v118, 0
    %v157 = vsel %vm146, %v119, 0
    %159 = vmatprep.subr.mxu0 0.0
    %160 = vmatpush1.msra.mxu0 0.0
    %161 = vmatprep.subr.mxu0 0.0
    %162 = vmatpush1.msra.mxu0 0.0
    %163 = vmatprep.subr.mxu0 0.0
    %164 = vmatpush1.msra.mxu0 0.0
    %165 = vmatprep.subr.mxu0 0.0
    %166 = vmatpush1.msra.mxu0 0.0
    %167 = vmatprep.subr.mxu0 0.0
    %168 = vmatpush1.msra.mxu0 0.0
    %169 = vmatprep.subr.mxu0 0.0
    %170 = vmatpush1.msra.mxu0 0.0
    %171 = vmatprep.subr.mxu0 0.0
    %172 = vmatpush1.msra.mxu0 0.0
    %173 = vmatprep.subr.mxu0 0.0
    %174 = vmatpush1.msra.mxu0 0.0
    %175 = vmatprep.subr.mxu0 0.0
    %176 = vmatpush1.msra.mxu0 0.0
    %177 = vmatprep.subr.mxu0 0.0
    %178 = vmatpush1.msra.mxu0 0.0
    %179 = vmatprep.subr.mxu0 0.0
    %180 = vmatpush1.msra.mxu0 0.0
    %181 = vmatprep.subr.mxu0 0.0
    %182 = vmatpush1.msra.mxu0 0.0
    %183 = vmatprep.subr.mxu0 0.0
    %184 = vmatpush1.msra.mxu0 0.0
    %185 = vmatprep.subr.mxu0 0.0
    %186 = vmatpush1.msra.mxu0 0.0
    %187 = vmatprep.subr.mxu0 %v151
    %188 = vmatpush1.msra.mxu0 %v148
    %189 = vmatprep.subr.mxu0 %v113
    %190 = vmatpush1.msra.mxu0 %v112
    %191 = vmatprep.subr.mxu0 0.0
    %192 = vmatpush2.msra.mxu0 0.0
    %193 = vmatprep.subr.mxu0 0.0
    %194 = vmatpush2.msra.mxu0 0.0
    %195 = vmatprep.subr.mxu0 0.0
    %196 = vmatpush2.msra.mxu0 0.0
    %197 = vmatprep.subr.mxu0 0.0
    %198 = vmatpush2.msra.mxu0 0.0
    %199 = vmatprep.subr.mxu0 0.0
    %200 = vmatpush2.msra.mxu0 0.0
    %201 = vmatprep.subr.mxu0 0.0
    %202 = vmatpush2.msra.mxu0 0.0
    %203 = vmatprep.subr.mxu0 0.0
    %204 = vmatpush2.msra.mxu0 0.0
    %205 = vmatprep.subr.mxu0 0.0
    %206 = vmatpush2.msra.mxu0 0.0
    %207 = vmatprep.subr.mxu0 0.0
    %208 = vmatpush2.msra.mxu0 0.0
    %209 = vmatprep.subr.mxu0 0.0
    %210 = vmatpush2.msra.mxu0 0.0
    %211 = vmatprep.subr.mxu0 0.0
    %212 = vmatpush2.msra.mxu0 0.0
    %213 = vmatprep.subr.mxu0 0.0
    %214 = vmatpush2.msra.mxu0 0.0
    %215 = vmatprep.subr.mxu0 0.0
    %216 = vmatpush2.msra.mxu0 0.0
    %217 = vmatprep.subr.mxu0 0.0
    %218 = vmatpush2.msra.mxu0 0.0
    %219 = vmatprep.subr.mxu0 0.0
    %220 = vmatpush2.msra.mxu0 0.0
    %221 = vmatprep.subr.mxu0 0.0
    %222 = vmatpush2.msra.mxu0 0.0
    %223 = vmatprep.mubr.f32.mxu0 0.0
    %224 = vmatmul.mubr.f32.gmra.mxu0 %v144
    %v225 = vpop.f32.mrf.mxu0
    %v226 = vadd.f32 %v125, %v225
    %v227 = vpop.f32.mrf.mxu0
    %v228 = vadd.f32 %v129, %v227
    %229 = vdwg.mxu0
    %230 = vmatprep.subr.mxu0 0.0
    %231 = vmatpush1.msra.mxu0 0.0
    %232 = vmatprep.subr.mxu0 0.0
    %233 = vmatpush1.msra.mxu0 0.0
    %234 = vmatprep.subr.mxu0 0.0
    %235 = vmatpush1.msra.mxu0 0.0
    %236 = vmatprep.subr.mxu0 0.0
    %237 = vmatpush1.msra.mxu0 0.0
    %238 = vmatprep.subr.mxu0 0.0
    %239 = vmatpush1.msra.mxu0 0.0
    %240 = vmatprep.subr.mxu0 0.0
    %241 = vmatpush1.msra.mxu0 0.0
    %242 = vmatprep.subr.mxu0 0.0
    %243 = vmatpush1.msra.mxu0 0.0
    %244 = vmatprep.subr.mxu0 0.0
    %245 = vmatpush1.msra.mxu0 0.0
    %246 = vmatprep.subr.mxu0 0.0
    %247 = vmatpush1.msra.mxu0 0.0
    %248 = vmatprep.subr.mxu0 0.0
    %249 = vmatpush1.msra.mxu0 0.0
    %250 = vmatprep.subr.mxu0 0.0
    %251 = vmatpush1.msra.mxu0 0.0
    %252 = vmatprep.subr.mxu0 0.0
    %253 = vmatpush1.msra.mxu0 0.0
    %254 = vmatprep.subr.mxu0 0.0
    %255 = vmatpush1.msra.mxu0 0.0
    %256 = vmatprep.subr.mxu0 0.0
    %257 = vmatpush1.msra.mxu0 0.0
    %258 = vmatprep.subr.mxu0 %v157
    %259 = vmatpush1.msra.mxu0 %v154
    %260 = vmatprep.subr.mxu0 %v115
    %261 = vmatpush1.msra.mxu0 %v114
    %262 = vmatprep.subr.mxu0 0.0
    %263 = vmatpush2.msra.mxu0 0.0
    %264 = vmatprep.subr.mxu0 0.0
    %265 = vmatpush2.msra.mxu0 0.0
    %266 = vmatprep.subr.mxu0 0.0
    %267 = vmatpush2.msra.mxu0 0.0
    %268 = vmatprep.subr.mxu0 0.0
    %269 = vmatpush2.msra.mxu0 0.0
    %270 = vmatprep.subr.mxu0 0.0
    %271 = vmatpush2.msra.mxu0 0.0
    %272 = vmatprep.subr.mxu0 0.0
    %273 = vmatpush2.msra.mxu0 0.0
    %274 = vmatprep.subr.mxu0 0.0
    %275 = vmatpush2.msra.mxu0 0.0
    %276 = vmatprep.subr.mxu0 0.0
    %277 = vmatpush2.msra.mxu0 0.0
    %278 = vmatprep.subr.mxu0 0.0
    %279 = vmatpush2.msra.mxu0 0.0
    %280 = vmatprep.subr.mxu0 0.0
    %281 = vmatpush2.msra.mxu0 0.0
    %282 = vmatprep.subr.mxu0 0.0
    %283 = vmatpush2.msra.mxu0 0.0
    %284 = vmatprep.subr.mxu0 0.0
    %285 = vmatpush2.msra.mxu0 0.0
    %286 = vmatprep.subr.mxu0 0.0
    %287 = vmatpush2.msra.mxu0 0.0
    %288 = vmatprep.subr.mxu0 0.0
    %289 = vmatpush2.msra.mxu0 0.0
    %290 = vmatprep.subr.mxu0 0.0
    %291 = vmatpush2.msra.mxu0 0.0
    %292 = vmatprep.subr.mxu0 0.0
    %293 = vmatpush2.msra.mxu0 0.0
    %294 = vmatprep.mubr.f32.mxu0 0.0
    %295 = vmatmul.mubr.f32.gmra.mxu0 %v144
    %v296 = vpop.f32.mrf.mxu0
    %v297 = vadd.f32 %v133, %v296
    %v298 = vpop.f32.mrf.mxu0
    %v299 = vadd.f32 %v137, %v298
    %300 = vdwg.mxu0
    %v301 = vmax.f32 %v226, 0.0
    %v302 = vmax.f32 %v228, 0.0
    %v303 = vmax.f32 %v297, 0.0
    %v304 = vmax.f32 %v299, 0.0
    %v305 = vpack.c.bf16 %v301, %v301
    %v306 = vpack.c.bf16 %v302, %v302
    %v307 = vpack.c.bf16 %v303, %v303
    %v308 = vpack.c.bf16 %v304, %v304
    %v309 = vld [vmem:[#allocation7] sm:$0xff]
    %v310 = vld [vmem:[#allocation7 + $0x8] sm:$0xff]
    %v311 = vld [vmem:[#allocation7 + $0x10] sm:$0xff]
    %v312 = vld [vmem:[#allocation7 + $0x18] sm:$0xff]
    %v313 = vld [vmem:[#allocation7 + $0x20] sm:$0xff]
    %v314 = vld [vmem:[#allocation7 + $0x28] sm:$0xff]
    %v315 = vld [vmem:[#allocation7 + $0x30] sm:$0xff]
    %v316 = vld [vmem:[#allocation7 + $0x38] sm:$0xff]
    %v317 = vld [vmem:[#allocation7 + $0x40] sm:$0xff]
    %v318 = vld [vmem:[#allocation7 + $0x48] sm:$0xff]
    %v319 = vld [vmem:[#allocation7 + $0x50] sm:$0xff]
    %v320 = vld [vmem:[#allocation7 + $0x58] sm:$0xff]
    %v321 = vld [vmem:[#allocation7 + $0x60] sm:$0xff]
    %v322 = vld [vmem:[#allocation7 + $0x68] sm:$0xff]
    %v323 = vld [vmem:[#allocation7 + $0x70] sm:$0xff]
    %v324 = vld [vmem:[#allocation7 + $0x78] sm:$0xff]
    %v325 = vld [vmem:[#allocation7 + $0x80] sm:$0xff]
    %v326 = vld [vmem:[#allocation7 + $0x88] sm:$0xff]
    %v327 = vld [vmem:[#allocation7 + $0x90] sm:$0xff]
    %v328 = vld [vmem:[#allocation7 + $0x98] sm:$0xff]
    %v329 = vld [vmem:[#allocation7 + $0xa0] sm:$0xff]
    %v330 = vld [vmem:[#allocation7 + $0xa8] sm:$0xff]
    %v331 = vld [vmem:[#allocation7 + $0xb0] sm:$0xff]
    %v332 = vld [vmem:[#allocation7 + $0xb8] sm:$0xff]
    %v333 = vld [vmem:[#allocation7 + $0xc0] sm:$0xff]
    %v334 = vld [vmem:[#allocation7 + $0xc8] sm:$0xff]
    %v335 = vld [vmem:[#allocation7 + $0xd0] sm:$0xff]
    %v336 = vld [vmem:[#allocation7 + $0xd8] sm:$0xff]
    %v337 = vld [vmem:[#allocation7 + $0xe0] sm:$0xff]
    %v338 = vld [vmem:[#allocation7 + $0xe8] sm:$0xff]
    %v339 = vld [vmem:[#allocation7 + $0xf0] sm:$0xff]
    %v340 = vld [vmem:[#allocation7 + $0xf8] sm:$0xff]
    %v341 = vld [vmem:[#allocation7 + $0x100] sm:$0xff]
    %v342 = vld [vmem:[#allocation7 + $0x108] sm:$0xff]
    %v343 = vld [vmem:[#allocation7 + $0x110] sm:$0xff]
    %v344 = vld [vmem:[#allocation7 + $0x118] sm:$0xff]
    %v345 = vld [vmem:[#allocation7 + $0x120] sm:$0xff]
    %v346 = vld [vmem:[#allocation7 + $0x128] sm:$0xff]
    %v347 = vld [vmem:[#allocation7 + $0x130] sm:$0xff]
    %v348 = vld [vmem:[#allocation7 + $0x138] sm:$0xff]
    %v349 = vld [vmem:[#allocation7 + $0x140] sm:$0xff]
    %v350 = vld [vmem:[#allocation7 + $0x148] sm:$0xff]
    %v351 = vld [vmem:[#allocation7 + $0x150] sm:$0xff]
    %v352 = vld [vmem:[#allocation7 + $0x158] sm:$0xff]
    %v353 = vld [vmem:[#allocation7 + $0x160] sm:$0xff]
    %v354 = vld [vmem:[#allocation7 + $0x168] sm:$0xff]
    %v355 = vld [vmem:[#allocation7 + $0x170] sm:$0xff]
    %v356 = vld [vmem:[#allocation7 + $0x178] sm:$0xff]
    %v357 = vld [vmem:[#allocation7 + $0x180] sm:$0xff]
    %v358 = vld [vmem:[#allocation7 + $0x188] sm:$0xff]
    %v359 = vld [vmem:[#allocation7 + $0x190] sm:$0xff]
    %v360 = vld [vmem:[#allocation7 + $0x198] sm:$0xff]
    %v361 = vld [vmem:[#allocation7 + $0x1a0] sm:$0xff]
    %v362 = vld [vmem:[#allocation7 + $0x1a8] sm:$0xff]
    %v363 = vld [vmem:[#allocation7 + $0x1b0] sm:$0xff]
    %v364 = vld [vmem:[#allocation7 + $0x1b8] sm:$0xff]
    %v365 = vld [vmem:[#allocation7 + $0x1c0] sm:$0xff]
    %v366 = vld [vmem:[#allocation7 + $0x1c8] sm:$0xff]
    %v367 = vld [vmem:[#allocation7 + $0x1d0] sm:$0xff]
    %v368 = vld [vmem:[#allocation7 + $0x1d8] sm:$0xff]
    %v369 = vld [vmem:[#allocation7 + $0x1e0] sm:$0xff]
    %v370 = vld [vmem:[#allocation7 + $0x1e8] sm:$0xff]
    %v371 = vld [vmem:[#allocation7 + $0x1f0] sm:$0xff]
    %v372 = vld [vmem:[#allocation7 + $0x1f8] sm:$0xff]
    %v373 = vld [vmem:[%s4] sm:$0x3]
    %v375 = vlaneseq
    %v376 = vshrl.u32 %v375, 7
    %v377 = vsub.s32 0, %v376
    %v378 = vrot.slane %v373, %v377
    %v379 = vlaneseq
    %v380 = vshrl.u32 %v379, 7
    %v381 = vsub.s32 1, %v380
    %v382 = vrot.slane %v373, %v381
    %v449 = vunpack.c.l.b16 %v309
    %v450 = vunpack.c.h.b16 %v309
    %v451 = vunpack.c.l.b16 %v310
    %v452 = vunpack.c.h.b16 %v310
    %v453 = vunpack.c.l.b16 %v311
    %v454 = vunpack.c.h.b16 %v311
    %v455 = vunpack.c.l.b16 %v312
    %v456 = vunpack.c.h.b16 %v312
    %v457 = vunpack.c.l.b16 %v313
    %v458 = vunpack.c.h.b16 %v313
    %v459 = vunpack.c.l.b16 %v314
    %v460 = vunpack.c.h.b16 %v314
    %v461 = vunpack.c.l.b16 %v315
    %v462 = vunpack.c.h.b16 %v315
    %v463 = vunpack.c.l.b16 %v316
    %v464 = vunpack.c.h.b16 %v316
    %v465 = vunpack.c.l.b16 %v317
    %v466 = vunpack.c.h.b16 %v317
    %v467 = vunpack.c.l.b16 %v318
    %v468 = vunpack.c.h.b16 %v318
    %v469 = vunpack.c.l.b16 %v319
    %v470 = vunpack.c.h.b16 %v319
    %v471 = vunpack.c.l.b16 %v320
    %v472 = vunpack.c.h.b16 %v320
    %v473 = vunpack.c.l.b16 %v321
    %v474 = vunpack.c.h.b16 %v321
    %v475 = vunpack.c.l.b16 %v322
    %v476 = vunpack.c.h.b16 %v322
    %v477 = vunpack.c.l.b16 %v323
    %v478 = vunpack.c.h.b16 %v323
    %v479 = vunpack.c.l.b16 %v324
    %v480 = vunpack.c.h.b16 %v324
    %v481 = vunpack.c.l.b16 %v325
    %v482 = vunpack.c.h.b16 %v325
    %v483 = vunpack.c.l.b16 %v326
    %v484 = vunpack.c.h.b16 %v326
    %v485 = vunpack.c.l.b16 %v327
    %v486 = vunpack.c.h.b16 %v327
    %v487 = vunpack.c.l.b16 %v328
    %v488 = vunpack.c.h.b16 %v328
    %v489 = vunpack.c.l.b16 %v329
    %v490 = vunpack.c.h.b16 %v329
    %v491 = vunpack.c.l.b16 %v330
    %v492 = vunpack.c.h.b16 %v330
    %v493 = vunpack.c.l.b16 %v331
    %v494 = vunpack.c.h.b16 %v331
    %v495 = vunpack.c.l.b16 %v332
    %v496 = vunpack.c.h.b16 %v332
    %v497 = vunpack.c.l.b16 %v333
    %v498 = vunpack.c.h.b16 %v333
    %v499 = vunpack.c.l.b16 %v334
    %v500 = vunpack.c.h.b16 %v334
    %v501 = vunpack.c.l.b16 %v335
    %v502 = vunpack.c.h.b16 %v335
    %v503 = vunpack.c.l.b16 %v336
    %v504 = vunpack.c.h.b16 %v336
    %v505 = vunpack.c.l.b16 %v337
    %v506 = vunpack.c.h.b16 %v337
    %v507 = vunpack.c.l.b16 %v338
    %v508 = vunpack.c.h.b16 %v338
    %v509 = vunpack.c.l.b16 %v339
    %v510 = vunpack.c.h.b16 %v339
    %v511 = vunpack.c.l.b16 %v340
    %v512 = vunpack.c.h.b16 %v340
    %v513 = vunpack.c.l.b16 %v341
    %v514 = vunpack.c.h.b16 %v341
    %v515 = vunpack.c.l.b16 %v342
    %v516 = vunpack.c.h.b16 %v342
    %v517 = vunpack.c.l.b16 %v343
    %v518 = vunpack.c.h.b16 %v343
    %v519 = vunpack.c.l.b16 %v344
    %v520 = vunpack.c.h.b16 %v344
    %v521 = vunpack.c.l.b16 %v345
    %v522 = vunpack.c.h.b16 %v345
    %v523 = vunpack.c.l.b16 %v346
    %v524 = vunpack.c.h.b16 %v346
    %v525 = vunpack.c.l.b16 %v347
    %v526 = vunpack.c.h.b16 %v347
    %v527 = vunpack.c.l.b16 %v348
    %v528 = vunpack.c.h.b16 %v348
    %v529 = vunpack.c.l.b16 %v349
    %v530 = vunpack.c.h.b16 %v349
    %v531 = vunpack.c.l.b16 %v350
    %v532 = vunpack.c.h.b16 %v350
    %v533 = vunpack.c.l.b16 %v351
    %v534 = vunpack.c.h.b16 %v351
    %v535 = vunpack.c.l.b16 %v352
    %v536 = vunpack.c.h.b16 %v352
    %v537 = vunpack.c.l.b16 %v353
    %v538 = vunpack.c.h.b16 %v353
    %v539 = vunpack.c.l.b16 %v354
    %v540 = vunpack.c.h.b16 %v354
    %v541 = vunpack.c.l.b16 %v355
    %v542 = vunpack.c.h.b16 %v355
    %v543 = vunpack.c.l.b16 %v356
    %v544 = vunpack.c.h.b16 %v356
    %v545 = vunpack.c.l.b16 %v357
    %v546 = vunpack.c.h.b16 %v357
    %v547 = vunpack.c.l.b16 %v358
    %v548 = vunpack.c.h.b16 %v358
    %v549 = vunpack.c.l.b16 %v359
    %v550 = vunpack.c.h.b16 %v359
    %v551 = vunpack.c.l.b16 %v360
    %v552 = vunpack.c.h.b16 %v360
    %v553 = vunpack.c.l.b16 %v361
    %v554 = vunpack.c.h.b16 %v361
    %v555 = vunpack.c.l.b16 %v362
    %v556 = vunpack.c.h.b16 %v362
    %v557 = vunpack.c.l.b16 %v363
    %v558 = vunpack.c.h.b16 %v363
    %v559 = vunpack.c.l.b16 %v364
    %v560 = vunpack.c.h.b16 %v364
    %v561 = vunpack.c.l.b16 %v365
    %v562 = vunpack.c.h.b16 %v365
    %v563 = vunpack.c.l.b16 %v366
    %v564 = vunpack.c.h.b16 %v366
    %v565 = vunpack.c.l.b16 %v367
    %v566 = vunpack.c.h.b16 %v367
    %v567 = vunpack.c.l.b16 %v368
    %v568 = vunpack.c.h.b16 %v368
    %v569 = vunpack.c.l.b16 %v369
    %v570 = vunpack.c.h.b16 %v369
    %v571 = vunpack.c.l.b16 %v370
    %v572 = vunpack.c.h.b16 %v370
    %v573 = vunpack.c.l.b16 %v371
    %v574 = vunpack.c.h.b16 %v371
    %v575 = vunpack.c.l.b16 %v372
    %v576 = vunpack.c.h.b16 %v372
    %v577 = vpack.c.b16 %v451, %v449
    %v578 = vpack.c.b16 %v452, %v450
    %v579 = vpack.c.b16 %v455, %v453
    %v580 = vpack.c.b16 %v456, %v454
    %v581 = vpack.c.b16 %v459, %v457
    %v582 = vpack.c.b16 %v460, %v458
    %v583 = vpack.c.b16 %v463, %v461
    %v584 = vpack.c.b16 %v464, %v462
    %v585 = vpack.c.b16 %v467, %v465
    %v586 = vpack.c.b16 %v468, %v466
    %v587 = vpack.c.b16 %v471, %v469
    %v588 = vpack.c.b16 %v472, %v470
    %v589 = vpack.c.b16 %v475, %v473
    %v590 = vpack.c.b16 %v476, %v474
    %v591 = vpack.c.b16 %v479, %v477
    %v592 = vpack.c.b16 %v480, %v478
    %v593 = vpack.c.b16 %v483, %v481
    %v594 = vpack.c.b16 %v484, %v482
    %v595 = vpack.c.b16 %v487, %v485
    %v596 = vpack.c.b16 %v488, %v486
    %v597 = vpack.c.b16 %v491, %v489
    %v598 = vpack.c.b16 %v492, %v490
    %v599 = vpack.c.b16 %v495, %v493
    %v600 = vpack.c.b16 %v496, %v494
    %v601 = vpack.c.b16 %v499, %v497
    %v602 = vpack.c.b16 %v500, %v498
    %v603 = vpack.c.b16 %v503, %v501
    %v604 = vpack.c.b16 %v504, %v502
    %v605 = vpack.c.b16 %v507, %v505
    %v606 = vpack.c.b16 %v508, %v506
    %v607 = vpack.c.b16 %v511, %v509
    %v608 = vpack.c.b16 %v512, %v510
    %v609 = vpack.c.b16 %v515, %v513
    %v610 = vpack.c.b16 %v516, %v514
    %v611 = vpack.c.b16 %v519, %v517
    %v612 = vpack.c.b16 %v520, %v518
    %v613 = vpack.c.b16 %v523, %v521
    %v614 = vpack.c.b16 %v524, %v522
    %v615 = vpack.c.b16 %v527, %v525
    %v616 = vpack.c.b16 %v528, %v526
    %v617 = vpack.c.b16 %v531, %v529
    %v618 = vpack.c.b16 %v532, %v530
    %v619 = vpack.c.b16 %v535, %v533
    %v620 = vpack.c.b16 %v536, %v534
    %v621 = vpack.c.b16 %v539, %v537
    %v622 = vpack.c.b16 %v540, %v538
    %v623 = vpack.c.b16 %v543, %v541
    %v624 = vpack.c.b16 %v544, %v542
    %v625 = vpack.c.b16 %v547, %v545
    %v626 = vpack.c.b16 %v548, %v546
    %v627 = vpack.c.b16 %v551, %v549
    %v628 = vpack.c.b16 %v552, %v550
    %v629 = vpack.c.b16 %v555, %v553
    %v630 = vpack.c.b16 %v556, %v554
    %v631 = vpack.c.b16 %v559, %v557
    %v632 = vpack.c.b16 %v560, %v558
    %v633 = vpack.c.b16 %v563, %v561
    %v634 = vpack.c.b16 %v564, %v562
    %v635 = vpack.c.b16 %v567, %v565
    %v636 = vpack.c.b16 %v568, %v566
    %v637 = vpack.c.b16 %v571, %v569
    %v638 = vpack.c.b16 %v572, %v570
    %v639 = vpack.c.b16 %v575, %v573
    %v640 = vpack.c.b16 %v576, %v574
    %705 = vmatprep.subr.bf16.mxu0 %v592
    %706 = vmatpush1.bf16.msra.mxu0 %v591
    %707 = vmatprep.subr.bf16.mxu0 %v590
    %708 = vmatpush1.bf16.msra.mxu0 %v589
    %709 = vmatprep.subr.bf16.mxu0 %v588
    %710 = vmatpush1.bf16.msra.mxu0 %v587
    %711 = vmatprep.subr.bf16.mxu0 %v586
    %712 = vmatpush1.bf16.msra.mxu0 %v585
    %713 = vmatprep.subr.bf16.mxu0 %v584
    %714 = vmatpush1.bf16.msra.mxu0 %v583
    %715 = vmatprep.subr.bf16.mxu0 %v582
    %716 = vmatpush1.bf16.msra.mxu0 %v581
    %717 = vmatprep.subr.bf16.mxu0 %v580
    %718 = vmatpush1.bf16.msra.mxu0 %v579
    %719 = vmatprep.subr.bf16.mxu0 %v578
    %720 = vmatpush1.bf16.msra.mxu0 %v577
    %721 = vmatprep.subr.bf16.mxu0 %v608
    %722 = vmatpush2.bf16.msra.mxu0 %v607
    %723 = vmatprep.subr.bf16.mxu0 %v606
    %724 = vmatpush2.bf16.msra.mxu0 %v605
    %725 = vmatprep.subr.bf16.mxu0 %v604
    %726 = vmatpush2.bf16.msra.mxu0 %v603
    %727 = vmatprep.subr.bf16.mxu0 %v602
    %728 = vmatpush2.bf16.msra.mxu0 %v601
    %729 = vmatprep.subr.bf16.mxu0 %v600
    %730 = vmatpush2.bf16.msra.mxu0 %v599
    %731 = vmatprep.subr.bf16.mxu0 %v598
    %732 = vmatpush2.bf16.msra.mxu0 %v597
    %733 = vmatprep.subr.bf16.mxu0 %v596
    %734 = vmatpush2.bf16.msra.mxu0 %v595
    %735 = vmatprep.subr.bf16.mxu0 %v594
    %736 = vmatpush2.bf16.msra.mxu0 %v593
    %737 = vmatprep.mubr.bf16.mxu0 %v306
    %738 = vmatmul.mubr.bf16.gmra.mxu0 %v305
    %v739 = vpop.f32.mrf.mxu0
    %v740 = vadd.f32 %v378, %v739
    %v741 = vpop.f32.mrf.mxu0
    %v742 = vadd.f32 %v382, %v741
    %v743 = vpop.f32.mrf.mxu0
    %v744 = vpop.f32.mrf.mxu0
    %745 = vdwg.mxu0
    %746 = vmatprep.subr.bf16.mxu0 %v624
    %747 = vmatpush1.bf16.msra.mxu0 %v623
    %748 = vmatprep.subr.bf16.mxu0 %v622
    %749 = vmatpush1.bf16.msra.mxu0 %v621
    %750 = vmatprep.subr.bf16.mxu0 %v620
    %751 = vmatpush1.bf16.msra.mxu0 %v619
    %752 = vmatprep.subr.bf16.mxu0 %v618
    %753 = vmatpush1.bf16.msra.mxu0 %v617
    %754 = vmatprep.subr.bf16.mxu0 %v616
    %755 = vmatpush1.bf16.msra.mxu0 %v615
    %756 = vmatprep.subr.bf16.mxu0 %v614
    %757 = vmatpush1.bf16.msra.mxu0 %v613
    %758 = vmatprep.subr.bf16.mxu0 %v612
    %759 = vmatpush1.bf16.msra.mxu0 %v611
    %760 = vmatprep.subr.bf16.mxu0 %v610
    %761 = vmatpush1.bf16.msra.mxu0 %v609
    %762 = vmatprep.subr.bf16.mxu0 %v640
    %763 = vmatpush2.bf16.msra.mxu0 %v639
    %764 = vmatprep.subr.bf16.mxu0 %v638
    %765 = vmatpush2.bf16.msra.mxu0 %v637
    %766 = vmatprep.subr.bf16.mxu0 %v636
    %767 = vmatpush2.bf16.msra.mxu0 %v635
    %768 = vmatprep.subr.bf16.mxu0 %v634
    %769 = vmatpush2.bf16.msra.mxu0 %v633
    %770 = vmatprep.subr.bf16.mxu0 %v632
    %771 = vmatpush2.bf16.msra.mxu0 %v631
    %772 = vmatprep.subr.bf16.mxu0 %v630
    %773 = vmatpush2.bf16.msra.mxu0 %v629
    %774 = vmatprep.subr.bf16.mxu0 %v628
    %775 = vmatpush2.bf16.msra.mxu0 %v627
    %776 = vmatprep.subr.bf16.mxu0 %v626
    %777 = vmatpush2.bf16.msra.mxu0 %v625
    %778 = vmatprep.mubr.bf16.mxu0 %v308
    %779 = vmatmul.mubr.bf16.gmra.mxu0 %v307
    %v780 = vpop.f32.mrf.mxu0
    %v781 = vadd.f32 %v740, %v780
    %v782 = vpop.f32.mrf.mxu0
    %v783 = vadd.f32 %v742, %v782
    %v784 = vpop.f32.mrf.mxu0
    %v785 = vpop.f32.mrf.mxu0
    %786 = vdwg.mxu0
    %v787 = vmax.f32 %v781, 0.0
    %v788 = vmax.f32 %v783, 0.0
    %v789 = vpack.c.bf16 %v787, %v787
    %v790 = vpack.c.bf16 %v788, %v788
    %v791 = vld [vmem:[#allocation9] sm:$0xf]
    %v792 = vld [vmem:[#allocation9 + $0x4] sm:$0xf]
    %v793 = vld [vmem:[#allocation9 + $0x8] sm:$0xf]
    %v794 = vld [vmem:[#allocation9 + $0xc] sm:$0xf]
    %v795 = vld [vmem:[#allocation9 + $0x10] sm:$0xf]
    %v796 = vld [vmem:[#allocation9 + $0x14] sm:$0xf]
    %v797 = vld [vmem:[#allocation9 + $0x18] sm:$0xf]
    %v798 = vld [vmem:[#allocation9 + $0x1c] sm:$0xf]
    %v799 = vld [vmem:[#allocation9 + $0x20] sm:$0xf]
    %v800 = vld [vmem:[#allocation9 + $0x24] sm:$0xf]
    %v801 = vld [vmem:[#allocation9 + $0x28] sm:$0xf]
    %v802 = vld [vmem:[#allocation9 + $0x2c] sm:$0xf]
    %v803 = vld [vmem:[#allocation9 + $0x30] sm:$0xf]
    %v804 = vld [vmem:[#allocation9 + $0x34] sm:$0xf]
    %v805 = vld [vmem:[#allocation9 + $0x38] sm:$0xf]
    %v806 = vld [vmem:[#allocation9 + $0x3c] sm:$0xf]
    %v807 = vld [vmem:[#allocation9 + $0x40] sm:$0xf]
    %v808 = vld [vmem:[#allocation9 + $0x44] sm:$0xf]
    %v809 = vld [vmem:[#allocation9 + $0x48] sm:$0xf]
    %v810 = vld [vmem:[#allocation9 + $0x4c] sm:$0xf]
    %v811 = vld [vmem:[#allocation9 + $0x50] sm:$0xf]
    %v812 = vld [vmem:[#allocation9 + $0x54] sm:$0xf]
    %v813 = vld [vmem:[#allocation9 + $0x58] sm:$0xf]
    %v814 = vld [vmem:[#allocation9 + $0x5c] sm:$0xf]
    %v815 = vld [vmem:[#allocation9 + $0x60] sm:$0xf]
    %v816 = vld [vmem:[#allocation9 + $0x64] sm:$0xf]
    %v817 = vld [vmem:[#allocation9 + $0x68] sm:$0xf]
    %v818 = vld [vmem:[#allocation9 + $0x6c] sm:$0xf]
    %v819 = vld [vmem:[#allocation9 + $0x70] sm:$0xf]
    %v820 = vld [vmem:[#allocation9 + $0x74] sm:$0xf]
    %v821 = vld [vmem:[#allocation9 + $0x78] sm:$0xf]
    %v822 = vld [vmem:[#allocation9 + $0x7c] sm:$0xf]
    %v823 = vld [vmem:[%s6] sm:$0x1]
    %v825 = vlaneseq
    %v826 = vshrl.u32 %v825, 7
    %v827 = vsub.s32 0, %v826
    %v828 = vrot.slane %v823, %v827
    %v862 = vunpack.c.l.b16 %v791
    %v863 = vunpack.c.l.b16 %v792
    %v864 = vunpack.c.l.b16 %v793
    %v865 = vunpack.c.l.b16 %v794
    %v866 = vunpack.c.l.b16 %v795
    %v867 = vunpack.c.l.b16 %v796
    %v868 = vunpack.c.l.b16 %v797
    %v869 = vunpack.c.l.b16 %v798
    %v870 = vunpack.c.l.b16 %v799
    %v871 = vunpack.c.l.b16 %v800
    %v872 = vunpack.c.l.b16 %v801
    %v873 = vunpack.c.l.b16 %v802
    %v874 = vunpack.c.l.b16 %v803
    %v875 = vunpack.c.l.b16 %v804
    %v876 = vunpack.c.l.b16 %v805
    %v877 = vunpack.c.l.b16 %v806
    %v878 = vunpack.c.l.b16 %v807
    %v879 = vunpack.c.l.b16 %v808
    %v880 = vunpack.c.l.b16 %v809
    %v881 = vunpack.c.l.b16 %v810
    %v882 = vunpack.c.l.b16 %v811
    %v883 = vunpack.c.l.b16 %v812
    %v884 = vunpack.c.l.b16 %v813
    %v885 = vunpack.c.l.b16 %v814
    %v886 = vunpack.c.l.b16 %v815
    %v887 = vunpack.c.l.b16 %v816
    %v888 = vunpack.c.l.b16 %v817
    %v889 = vunpack.c.l.b16 %v818
    %v890 = vunpack.c.l.b16 %v819
    %v891 = vunpack.c.l.b16 %v820
    %v892 = vunpack.c.l.b16 %v821
    %v893 = vunpack.c.l.b16 %v822
    %v894 = vpack.c.b16 %v863, %v862
    %v895 = vpack.c.b16 %v865, %v864
    %v896 = vpack.c.b16 %v867, %v866
    %v897 = vpack.c.b16 %v869, %v868
    %v898 = vpack.c.b16 %v871, %v870
    %v899 = vpack.c.b16 %v873, %v872
    %v900 = vpack.c.b16 %v875, %v874
    %v901 = vpack.c.b16 %v877, %v876
    %v902 = vpack.c.b16 %v879, %v878
    %v903 = vpack.c.b16 %v881, %v880
    %v904 = vpack.c.b16 %v883, %v882
    %v905 = vpack.c.b16 %v885, %v884
    %v906 = vpack.c.b16 %v887, %v886
    %v907 = vpack.c.b16 %v889, %v888
    %v908 = vpack.c.b16 %v891, %v890
    %v909 = vpack.c.b16 %v893, %v892
    %926 = vmatprep.subr.bf16.mxu0 0
    %927 = vmatpush1.bf16.msra.mxu0 %v901
    %928 = vmatprep.subr.bf16.mxu0 0
    %929 = vmatpush1.bf16.msra.mxu0 %v900
    %930 = vmatprep.subr.bf16.mxu0 0
    %931 = vmatpush1.bf16.msra.mxu0 %v899
    %932 = vmatprep.subr.bf16.mxu0 0
    %933 = vmatpush1.bf16.msra.mxu0 %v898
    %934 = vmatprep.subr.bf16.mxu0 0
    %935 = vmatpush1.bf16.msra.mxu0 %v897
    %936 = vmatprep.subr.bf16.mxu0 0
    %937 = vmatpush1.bf16.msra.mxu0 %v896
    %938 = vmatprep.subr.bf16.mxu0 0
    %939 = vmatpush1.bf16.msra.mxu0 %v895
    %940 = vmatprep.subr.bf16.mxu0 0
    %941 = vmatpush1.bf16.msra.mxu0 %v894
    %942 = vmatprep.subr.bf16.mxu0 0
    %943 = vmatpush2.bf16.msra.mxu0 %v909
    %944 = vmatprep.subr.bf16.mxu0 0
    %945 = vmatpush2.bf16.msra.mxu0 %v908
    %946 = vmatprep.subr.bf16.mxu0 0
    %947 = vmatpush2.bf16.msra.mxu0 %v907
    %948 = vmatprep.subr.bf16.mxu0 0
    %949 = vmatpush2.bf16.msra.mxu0 %v906
    %950 = vmatprep.subr.bf16.mxu0 0
    %951 = vmatpush2.bf16.msra.mxu0 %v905
    %952 = vmatprep.subr.bf16.mxu0 0
    %953 = vmatpush2.bf16.msra.mxu0 %v904
    %954 = vmatprep.subr.bf16.mxu0 0
    %955 = vmatpush2.bf16.msra.mxu0 %v903
    %956 = vmatprep.subr.bf16.mxu0 0
    %957 = vmatpush2.bf16.msra.mxu0 %v902
    %958 = vmatprep.mubr.bf16.mxu0 %v790
    %959 = vmatmul.mubr.bf16.gmra.mxu0 %v789
    %v960 = vpop.f32.mrf.mxu0
    %v961 = vadd.f32 %v828, %v960
    %v962 = vpop.f32.mrf.mxu0
    %v963 = vpop.f32.mrf.mxu0
    %v964 = vpop.f32.mrf.mxu0
    %965 = vdwg.mxu0
    %v966 = vmax.f32 %v961, 0.0
    %v967 = vpack.c.bf16 %v966, %v966
    %v968 = vld [vmem:[#allocation10] sm:$0xf]
    %v969 = vld [vmem:[#allocation10 + $0x4] sm:$0xf]
    %v970 = vld [vmem:[#allocation10 + $0x8] sm:$0xf]
    %v971 = vld [vmem:[#allocation10 + $0xc] sm:$0xf]
    %v972 = vld [vmem:[#allocation10 + $0x10] sm:$0xf]
    %v973 = vld [vmem:[#allocation10 + $0x14] sm:$0xf]
    %v974 = vld [vmem:[#allocation10 + $0x18] sm:$0xf]
    %v975 = vld [vmem:[#allocation10 + $0x1c] sm:$0xf]
    %v976 = vld [vmem:[#allocation10 + $0x20] sm:$0xf]
    %v977 = vld [vmem:[#allocation10 + $0x24] sm:$0xf]
    %v978 = vld [vmem:[#allocation10 + $0x28] sm:$0xf]
    %v979 = vld [vmem:[#allocation10 + $0x2c] sm:$0xf]
    %v980 = vld [vmem:[#allocation10 + $0x30] sm:$0xf]
    %v981 = vld [vmem:[#allocation10 + $0x34] sm:$0xf]
    %v982 = vld [vmem:[#allocation10 + $0x38] sm:$0xf]
    %v983 = vld [vmem:[#allocation10 + $0x3c] sm:$0xf]
    %v984 = vld [vmem:[%s8] sm:$0x1]
    %v986 = vlaneseq
    %v987 = vshrl.u32 %v986, 7
    %v988 = vsub.s32 0, %v987
    %v989 = vrot.slane %v984, %v988
    %v1007 = vunpack.c.l.b16 %v968
    %v1008 = vunpack.c.l.b16 %v969
    %v1009 = vunpack.c.l.b16 %v970
    %v1010 = vunpack.c.l.b16 %v971
    %v1011 = vunpack.c.l.b16 %v972
    %v1012 = vunpack.c.l.b16 %v973
    %v1013 = vunpack.c.l.b16 %v974
    %v1014 = vunpack.c.l.b16 %v975
    %v1015 = vunpack.c.l.b16 %v976
    %v1016 = vunpack.c.l.b16 %v977
    %v1017 = vunpack.c.l.b16 %v978
    %v1018 = vunpack.c.l.b16 %v979
    %v1019 = vunpack.c.l.b16 %v980
    %v1020 = vunpack.c.l.b16 %v981
    %v1021 = vunpack.c.l.b16 %v982
    %v1022 = vunpack.c.l.b16 %v983
    %v1023 = vpack.c.b16 %v1008, %v1007
    %v1024 = vpack.c.b16 %v1010, %v1009
    %v1025 = vpack.c.b16 %v1012, %v1011
    %v1026 = vpack.c.b16 %v1014, %v1013
    %v1027 = vpack.c.b16 %v1016, %v1015
    %v1028 = vpack.c.b16 %v1018, %v1017
    %v1029 = vpack.c.b16 %v1020, %v1019
    %v1030 = vpack.c.b16 %v1022, %v1021
    %1039 = vmatprep.subr.bf16.mxu0 0
    %1040 = vmatpush1.bf16.msra.mxu0 %v1030
    %1041 = vmatprep.subr.bf16.mxu0 0
    %1042 = vmatpush1.bf16.msra.mxu0 %v1029
    %1043 = vmatprep.subr.bf16.mxu0 0
    %1044 = vmatpush1.bf16.msra.mxu0 %v1028
    %1045 = vmatprep.subr.bf16.mxu0 0
    %1046 = vmatpush1.bf16.msra.mxu0 %v1027
    %1047 = vmatprep.subr.bf16.mxu0 0
    %1048 = vmatpush1.bf16.msra.mxu0 %v1026
    %1049 = vmatprep.subr.bf16.mxu0 0
    %1050 = vmatpush1.bf16.msra.mxu0 %v1025
    %1051 = vmatprep.subr.bf16.mxu0 0
    %1052 = vmatpush1.bf16.msra.mxu0 %v1024
    %1053 = vmatprep.subr.bf16.mxu0 0
    %1054 = vmatpush1.bf16.msra.mxu0 %v1023
    %1055 = vmatprep.subr.bf16.mxu0 0
    %1056 = vmatpush2.bf16.msra.mxu0 0
    %1057 = vmatprep.subr.bf16.mxu0 0
    %1058 = vmatpush2.bf16.msra.mxu0 0
    %1059 = vmatprep.subr.bf16.mxu0 0
    %1060 = vmatpush2.bf16.msra.mxu0 0
    %1061 = vmatprep.subr.bf16.mxu0 0
    %1062 = vmatpush2.bf16.msra.mxu0 0
    %1063 = vmatprep.subr.bf16.mxu0 0
    %1064 = vmatpush2.bf16.msra.mxu0 0
    %1065 = vmatprep.subr.bf16.mxu0 0
    %1066 = vmatpush2.bf16.msra.mxu0 0
    %1067 = vmatprep.subr.bf16.mxu0 0
    %1068 = vmatpush2.bf16.msra.mxu0 0
    %1069 = vmatprep.subr.bf16.mxu0 0
    %1070 = vmatpush2.bf16.msra.mxu0 0
    %1071 = vmatprep.mubr.bf16.mxu0 0
    %1072 = vmatmul.mubr.bf16.gmra.mxu0 %v967
    %v1073 = vpop.f32.mrf.mxu0
    %v1074 = vadd.f32 %v989, %v1073
    %v1075 = vpop.f32.mrf.mxu0
    %v1076 = vpop.f32.mrf.mxu0
    %v1077 = vpop.f32.mrf.mxu0
    %1078 = vdwg.mxu0
    %v1079 = vpack.c.bf16 %v1074, %v1074
    %1080 = vst [vmem:[%s9] sm:$0xf] %v1079
    // Predicated region
    $region62: #{net_forward.1} parent=1 // pred_check
      _
    $region63: #{net_forward.1} parent=1 // pred_check_branch
      %1082 = sbr.rel (0) target = $region65
    $region64: #{net_forward.1} parent=1 // pred_region
      _
    $region65: #{net_forward.1} parent=1 // pred_fallthru
      _
    // Predicated region
    $region66: #{net_forward.1} parent=1 // pred_check
      _
    $region67: #{net_forward.1} parent=1 // pred_check_branch
      %1084 = sbr.rel (0) target = $region69
    $region68: #{net_forward.1} parent=1 // pred_region
      _
    $region69: #{net_forward.1} parent=1 // pred_fallthru
      _
    %1085 = vsyncpa [#allocation3], 1
    %1086 = vsyncpa [#allocation5], 1
    %1087 = vsyncpa [#allocation8], 1
    %1088 = vsyncpa [#allocation11], 1

</llo_original>
